<compile_context>
chip_gen: v5e
topology: v5e:2x2
jax: 0.10.0
libtpu: 0.0.40
codegen_flags: <defaults>
</compile_context>

<pallas_src>
import jax
import jax.numpy as jnp
from jax.experimental import pallas as pl
from jax.experimental.pallas import tpu as pltpu


def _mlp_kernel(x_ref, w1_ref, b1_ref, w2_ref, b2_ref, w3_ref, b3_ref, o_ref):
    cdt = w1_ref.dtype  # compute/storage dtype of weights & activations (f32 or bf16)

    # In-kernel cast of x (VPU op, runs under MXU/DMA slack) instead of a
    # wrapper-side XLA cast that would cost an extra HBM read+write of x.
    x = x_ref[...].astype(cdt)

    # Layer 1: Linear + ReLU   (Dropout = identity in eval mode)
    h1 = jnp.dot(x, w1_ref[...], preferred_element_type=jnp.float32)
    h1 = jnp.maximum(h1 + b1_ref[...], 0.0).astype(cdt)

    # Layer 2: Linear + ReLU   (Dropout = identity in eval mode)
    h2 = jnp.dot(h1, w2_ref[...], preferred_element_type=jnp.float32)
    h2 = jnp.maximum(h2 + b2_ref[...], 0.0)  # keep f32: layer 3 is negligible compute

    # Layer 3: h2 [tile_b, H] @ w3_col [H, 1] -> [tile_b, 1].
    # MXU-native contraction (LHS minor with RHS major) -- no XLU transpose of
    # the large h2 tile.  Casting the 128-element w3 column to f32 is free.
    out = jnp.dot(h2, w3_ref[...].astype(jnp.float32),
                  preferred_element_type=jnp.float32)
    o_ref[...] = out + b3_ref[0]  # scalar bias from SMEM


def mlp_surrogate_forward(x, params, *, tile_b=2048):
    """x: [B, input_dim]. Returns [B, 1] float32.

    params = (w1 [D,H], b1 [1,H], w2 [H,H], b2 [1,H], w3 [H,1], b3 [1] f32).
    `tile_b` (multiple of 128) is the primary tuning knob; 1024-4096 is the
    sweet spot at H=128 (per-step MXU work >> ~0.35 us per-grid-step overhead,
    VMEM well under every generation's scoped default).
    """
    w1, b1, w2, b2, w3, b3 = params
    B, D = x.shape
    H = w1.shape[1]

    assert tile_b % 128 == 0, "tile_b must be a multiple of 128"

    # Clamp: never exceed the 128-rounded batch; for batches spanning >= 2
    # 128-row tiles, cap the tile at ~half the batch so the grid always has
    # >= 2 "parallel" steps (v7x has 2 TensorCores -- a 1-step grid idles one).
    b_pad = ((B + 127) // 128) * 128
    if b_pad >= 256:
        tile_cap = (((B + 1) // 2 + 127) // 128) * 128
    else:
        tile_cap = b_pad
    tile_b = max(128, min(tile_b, tile_cap))
    num_tiles = pl.cdiv(B, tile_b)
    b_out = num_tiles * tile_b

    # NOTE / CORRECTNESS: when B is not a multiple of tile_b, the last x block
    # reads past the end of the array (undefined/stale rows).  This is ONLY
    # safe because every op in the kernel is row-independent and the garbage
    # output rows (indices >= B) are sliced off below.  Any future cross-row
    # reduction inside the kernel (batch norm, loss sum, NaN checks) would be
    # silently corrupted by those rows.
    cdt = w1.dtype

    flops = 2 * b_out * (D * H + H * H + H)
    bytes_accessed = int(
        x.size * x.dtype.itemsize
        + sum(int(p.size) * p.dtype.itemsize for p in (w1, b1, w2, b2, w3, b3))
        + b_out * 4)

    # Weight blocks are grid-invariant (index_map -> (0,0)).  At H=128 their
    # double-buffered VMEM footprint is noise; if hidden_dim is scaled up
    # (H >= ~1024, esp. on v7x's 64 MiB VMEM) switch W2/W3 to pl.ANY + a
    # one-time manual copy.  If tile_b is pushed past ~8192 with f32
    # activations on v5e (16 MiB scoped default), set vmem_limit_bytes or use
    # the bf16 param path.
    y = pl.pallas_call(
        _mlp_kernel,
        out_shape=jax.ShapeDtypeStruct((b_out, 1), jnp.float32),
        grid_spec=pltpu.PrefetchScalarGridSpec(
            num_scalar_prefetch=0,
            grid=(num_tiles,),
            in_specs=[
                pl.BlockSpec((tile_b, D), lambda i: (i, 0)),   # x tile (dtype as given)
                pl.BlockSpec((D, H), lambda i: (0, 0)),        # W1
                pl.BlockSpec((1, H), lambda i: (0, 0)),        # b1
                pl.BlockSpec((H, H), lambda i: (0, 0)),        # W2
                pl.BlockSpec((1, H), lambda i: (0, 0)),        # b2
                pl.BlockSpec((H, 1), lambda i: (0, 0)),        # W3 (column form)
                pl.BlockSpec(memory_space=pltpu.MemorySpace.SMEM),  # b3 scalar
            ],
            out_specs=pl.BlockSpec((tile_b, 1), lambda i: (i, 0)),
        ),
        compiler_params=pltpu.CompilerParams(
            # "parallel" batch axis -> megacore sharding on v7x (the tile_b
            # clamp above keeps >= 2 grid steps whenever the batch allows it).
            dimension_semantics=("parallel",)),
        cost_estimate=pl.CostEstimate(
            flops=flops, transcendentals=0, bytes_accessed=bytes_accessed),
    )(x, w1, b1, w2, b2, w3, b3)

    # Drop the padded tail rows (>= B) produced by the partial last block.
    return y[:B]


def init_params(key, input_dim, hidden_dim):
    """nn.Linear-style uniform(-1/sqrt(fan_in), +1/sqrt(fan_in)) init.

    Layout: W as [in_features, out_features]; biases as [1, H]; final layer
    stored as an [H, 1] column with a scalar f32 bias.
    """
    ks = jax.random.split(key, 6)

    def lin(kw, kb, fan_in, fan_out):
        bound = 1.0 / float(fan_in) ** 0.5
        w = jax.random.uniform(kw, (fan_in, fan_out), jnp.float32, -bound, bound)
        b = jax.random.uniform(kb, (fan_out,), jnp.float32, -bound, bound)
        return w, b

    w1, b1 = lin(ks[0], ks[1], input_dim, hidden_dim)
    w2, b2 = lin(ks[2], ks[3], hidden_dim, hidden_dim)
    w3, b3 = lin(ks[4], ks[5], hidden_dim, 1)
    return (w1, b1.reshape(1, hidden_dim),
            w2, b2.reshape(1, hidden_dim),
            w3,                                   # [H, 1] column
            b3.reshape(1).astype(jnp.float32))    # scalar bias (SMEM, stays f32)


def cast_params(params, dtype):
    """Cast weights/biases to `dtype` (e.g. bf16 on v5e/v6e/v7x); b3 stays f32."""
    w1, b1, w2, b2, w3, b3 = params
    return (w1.astype(dtype), b1.astype(dtype),
            w2.astype(dtype), b2.astype(dtype),
            w3.astype(dtype), b3)


def _reference(x, params):
    w1, b1, w2, b2, w3, b3 = [jnp.asarray(p, jnp.float32) for p in params]
    x = x.astype(jnp.float32)
    h1 = jnp.maximum(x @ w1 + b1, 0.0)
    h2 = jnp.maximum(h1 @ w2 + b2, 0.0)
    return h2 @ w3 + b3  # [B, 1]


if __name__ == "__main__":
    INPUT_DIM = 16
    HIDDEN_DIM = 128

    key = jax.random.PRNGKey(0)
    k_x1, k_x2, k_p = jax.random.split(key, 3)
    params_f32 = init_params(k_p, INPUT_DIM, HIDDEN_DIM)

    # TODO(synk): nn.Dropout has no effect in eval mode; training-mode dropout
    # (random masking with pltpu PRNG) is intentionally not applied here.

    # Case 1: small batch, single grid step, f32 params (tight tolerance).
    x1 = jax.random.normal(k_x1, (8, INPUT_DIM), jnp.float32)
    y1 = mlp_surrogate_forward(x1, params_f32)
    jax.block_until_ready(y1)
    y1_ref = _reference(x1, params_f32)
    assert y1.shape == (8, 1)
    assert jnp.allclose(y1, y1_ref, atol=1e-4, rtol=1e-4), (
        float(jnp.max(jnp.abs(y1 - y1_ref))))

    # Case 2: ragged batch spanning multiple grid steps, bf16 params
    # (f32 MXU accumulation, in-kernel x cast; relaxed tolerance).
    params_bf16 = cast_params(params_f32, jnp.bfloat16)
    x2 = jax.random.normal(k_x2, (300, INPUT_DIM), jnp.float32)
    y2 = mlp_surrogate_forward(x2, params_bf16)
    jax.block_until_ready(y2)
    y2_ref = _reference(x2, params_bf16)
    assert y2.shape == (300, 1)
    assert jnp.allclose(y2, y2_ref, atol=5e-2, rtol=5e-2), (
        float(jnp.max(jnp.abs(y2 - y2_ref))))

    print("KERNEL_OK")
</pallas_src>

<mosaic_0001>
module attributes {stable_mosaic.version = 11 : i64} {
  func.func @_mlp_kernel(%arg0: i32, %arg1: memref<128x16xf32, #tpu.memory_space<vmem>>, %arg2: memref<16x128xf32, #tpu.memory_space<vmem>>, %arg3: memref<1x128xf32, #tpu.memory_space<vmem>>, %arg4: memref<128x128xf32, #tpu.memory_space<vmem>>, %arg5: memref<1x128xf32, #tpu.memory_space<vmem>>, %arg6: memref<128x1xf32, #tpu.memory_space<vmem>>, %arg7: memref<1xf32, #tpu.memory_space<smem>>, %arg8: memref<128x1xf32, #tpu.memory_space<vmem>>) attributes {dimension_semantics = [#tpu.dimension_semantics<parallel>], iteration_bounds = array<i64: 1>, scalar_prefetch = 0 : i64, scratch_operands = 0 : i64, tpu.core_type = #tpu.core_type<tc>, window_params = [{transform_indices = @transform_0, window_bounds = array<i64: 128, 16>}, {pipeline_mode = #tpu.pipeline_mode<synchronous>, transform_indices = @transform_1, window_bounds = array<i64: 16, 128>}, {pipeline_mode = #tpu.pipeline_mode<synchronous>, transform_indices = @transform_2, window_bounds = array<i64: 1, 128>}, {pipeline_mode = #tpu.pipeline_mode<synchronous>, transform_indices = @transform_3, window_bounds = array<i64: 128, 128>}, {pipeline_mode = #tpu.pipeline_mode<synchronous>, transform_indices = @transform_4, window_bounds = array<i64: 1, 128>}, {pipeline_mode = #tpu.pipeline_mode<synchronous>, transform_indices = @transform_5, window_bounds = array<i64: 128, 1>}, {transform_indices = @transform_6, window_bounds = array<i64: 1>}, {transform_indices = @transform_7, window_bounds = array<i64: 128, 1>}]} {
    %c0 = arith.constant 0 : index
    %c0_0 = arith.constant 0 : index
    %0 = vector.load %arg1[%c0, %c0_0] : memref<128x16xf32, #tpu.memory_space<vmem>>, vector<128x16xf32>
    %c0_1 = arith.constant 0 : index
    %c0_2 = arith.constant 0 : index
    %1 = vector.load %arg2[%c0_1, %c0_2] : memref<16x128xf32, #tpu.memory_space<vmem>>, vector<16x128xf32>
    %cst = arith.constant dense<0.000000e+00> : vector<128x128xf32>
    %2 = tpu.matmul %0, %1, %cst {dimension_numbers = #tpu.dot_dimension_numbers<[1], [0], [0], [1], [0, 0, 1, 1], [], []>} : vector<128x16xf32>, vector<16x128xf32>, vector<128x128xf32> -> vector<128x128xf32>
    %c0_3 = arith.constant 0 : index
    %c0_4 = arith.constant 0 : index
    %3 = vector.load %arg3[%c0_3, %c0_4] : memref<1x128xf32, #tpu.memory_space<vmem>>, vector<1x128xf32>
    %4 = vector.broadcast %3 : vector<1x128xf32> to vector<128x128xf32>
    %5 = arith.addf %2, %4 : vector<128x128xf32>
    %cst_5 = arith.constant 0.000000e+00 : f32
    %6 = vector.broadcast %cst_5 : f32 to vector<128x128xf32>
    %7 = arith.maximumf %5, %6 : vector<128x128xf32>
    %c0_6 = arith.constant 0 : index
    %c0_7 = arith.constant 0 : index
    %8 = vector.load %arg4[%c0_6, %c0_7] : memref<128x128xf32, #tpu.memory_space<vmem>>, vector<128x128xf32>
    %cst_8 = arith.constant dense<0.000000e+00> : vector<128x128xf32>
    %9 = tpu.matmul %7, %8, %cst_8 {dimension_numbers = #tpu.dot_dimension_numbers<[1], [0], [0], [1], [0, 0, 1, 1], [], []>} : vector<128x128xf32>, vector<128x128xf32>, vector<128x128xf32> -> vector<128x128xf32>
    %c0_9 = arith.constant 0 : index
    %c0_10 = arith.constant 0 : index
    %10 = vector.load %arg5[%c0_9, %c0_10] : memref<1x128xf32, #tpu.memory_space<vmem>>, vector<1x128xf32>
    %11 = vector.broadcast %10 : vector<1x128xf32> to vector<128x128xf32>
    %12 = arith.addf %9, %11 : vector<128x128xf32>
    %cst_11 = arith.constant 0.000000e+00 : f32
    %13 = vector.broadcast %cst_11 : f32 to vector<128x128xf32>
    %14 = arith.maximumf %12, %13 : vector<128x128xf32>
    %c0_12 = arith.constant 0 : index
    %c0_13 = arith.constant 0 : index
    %15 = vector.load %arg6[%c0_12, %c0_13] : memref<128x1xf32, #tpu.memory_space<vmem>>, vector<128x1xf32>
    %cst_14 = arith.constant dense<0.000000e+00> : vector<128x1xf32>
    %16 = tpu.matmul %14, %15, %cst_14 {dimension_numbers = #tpu.dot_dimension_numbers<[1], [0], [0], [1], [0, 0, 1, 1], [], []>} : vector<128x128xf32>, vector<128x1xf32>, vector<128x1xf32> -> vector<128x1xf32>
    %c0_15 = arith.constant 0 : index
    %17 = memref.load %arg7[%c0_15] : memref<1xf32, #tpu.memory_space<smem>>
    %18 = vector.broadcast %17 : f32 to vector<128x1xf32>
    %19 = arith.addf %16, %18 : vector<128x1xf32>
    %c0_16 = arith.constant 0 : index
    %c0_17 = arith.constant 0 : index
    %20 = vector.load %arg8[%c0_16, %c0_17] : memref<128x1xf32, #tpu.memory_space<vmem>>, vector<128x1xf32>
    tpu.vector_store %arg8[%c0_16, %c0_17], %19 {strides = array<i32>} : memref<128x1xf32, #tpu.memory_space<vmem>>, vector<128x1xf32>,
    return
  }
  func.func @transform_0(%arg0: i32) -> (i32, i32) {
    %c0_i32 = arith.constant 0 : i32
    %c0_i32_0 = arith.constant 0 : i32
    return %arg0, %c0_i32 : i32, i32
  }
  func.func @transform_1(%arg0: i32) -> (i32, i32) {
    %c0_i32 = arith.constant 0 : i32
    %c0_i32_0 = arith.constant 0 : i32
    %c0_i32_1 = arith.constant 0 : i32
    return %c0_i32, %c0_i32_0 : i32, i32
  }
  func.func @transform_2(%arg0: i32) -> (i32, i32) {
    %c0_i32 = arith.constant 0 : i32
    %c0_i32_0 = arith.constant 0 : i32
    %c0_i32_1 = arith.constant 0 : i32
    return %c0_i32, %c0_i32_0 : i32, i32
  }
  func.func @transform_3(%arg0: i32) -> (i32, i32) {
    %c0_i32 = arith.constant 0 : i32
    %c0_i32_0 = arith.constant 0 : i32
    %c0_i32_1 = arith.constant 0 : i32
    return %c0_i32, %c0_i32_0 : i32, i32
  }
  func.func @transform_4(%arg0: i32) -> (i32, i32) {
    %c0_i32 = arith.constant 0 : i32
    %c0_i32_0 = arith.constant 0 : i32
    %c0_i32_1 = arith.constant 0 : i32
    return %c0_i32, %c0_i32_0 : i32, i32
  }
  func.func @transform_5(%arg0: i32) -> (i32, i32) {
    %c0_i32 = arith.constant 0 : i32
    %c0_i32_0 = arith.constant 0 : i32
    %c0_i32_1 = arith.constant 0 : i32
    return %c0_i32, %c0_i32_0 : i32, i32
  }
  func.func @transform_6(%arg0: i32) -> i32 {
    %c0_i32 = arith.constant 0 : i32
    %c0_i32_0 = arith.constant 0 : i32
    return %c0_i32 : i32
  }
  func.func @transform_7(%arg0: i32) -> (i32, i32) {
    %c0_i32 = arith.constant 0 : i32
    %c0_i32_0 = arith.constant 0 : i32
    return %arg0, %c0_i32 : i32, i32
  }
}

</mosaic_0001>

<llo_original>
// kernel: tpu_custom_call.1
$region0: #{tpu_custom_call.1}
  #allocation0 [shape = 'u32[]', space=smem, size = 0x4, offset = 0x4, fixed_abs, tag = 'smem constant byte address 0x4 - core index']
  #allocation1 [shape = 'u32[72,128]{1,0:T(1,128)}', space=vmem, size = 0x9000, scoped, tag = 'internal scratch']
  #allocation2 [shape = 'f32[1]{0:T(128)S(6)}', space=smem, size = 0x200, scoped, tag = 'scoped memory for tpu_custom_call.1']
  %s0 = inlined_call_operand.hbm [shape: f32[8,16], index: 0, kind: input, shape index: {}]
  %s1 = inlined_call_operand.hbm [shape: f32[16,128], index: 1, kind: input, shape index: {}]
  %s2 = inlined_call_operand.vmem [shape: f32[1,128], index: 2, kind: input, shape index: {}]
  %s3 = inlined_call_operand.vmem [shape: f32[128,128], index: 3, kind: input, shape index: {}]
  %s4 = inlined_call_operand.vmem [shape: f32[1,128], index: 4, kind: input, shape index: {}]
  %s5 = inlined_call_operand.vmem [shape: f32[128,1], index: 5, kind: input, shape index: {}]
  %s6 = inlined_call_operand.<no memory space> [shape: f32[1], index: 6, kind: input, shape index: {}]
  %s7 = inlined_call_operand.vmem [shape: f32[128,1], index: 7, kind: output, shape index: {}]
  %s8 = sld [smem:[#allocation0]]
  $region46: #{tpu_custom_call.1} parent=0
    _
  %s10 = ssub.s32 1, %s8
  %s11 = scalar_select 0, %s10, %s8
  %12 = sst [smem:[#allocation2]] %s6
  $region1: #{tpu_custom_call.1} parent=0
    #allocation3 [shape = 'u8[65536]{0}', space=vmem, size = 0x10000, scoped, tag = 'input window, operand 0, single buffered']
    #allocation4 [shape = 's32[1]{0}', space=sflag, size = 0x4, scoped, tag = 'scoped memory for tpu_custom_call.1']
    #allocation5 [shape = 'u8[8192]{0}', space=vmem, size = 0x2000, scoped, tag = 'input window, operand 1, single buffered']
    #allocation6 [shape = 's32[1]{0}', space=sflag, size = 0x4, scoped, tag = 'scoped memory for tpu_custom_call.1']
    %13 = vsyncpa [#allocation4], 0
    %14 = vsyncpa [#allocation6], 0
    // Predicated region
    $region2: #{tpu_custom_call.1} parent=1 // pred_check
      _
    $region3: #{tpu_custom_call.1} parent=1 // pred_check_branch
      %16 = sbr.rel (0) target = $region5
    $region4: #{tpu_custom_call.1} parent=1 // pred_region
      %18 = vsyncadd [#allocation4], 1920
      %s19 = sshll.u32 %s0, 4
      %s20 = int_to_ptr.hbm [resolvable:$true] %s19
      %s21 = sshll.u32 [#allocation3], 4
      %s22 = int_to_ptr.vmem [resolvable:$true] %s21
      %27 = dma.hbm_to_vmem [thread:$0]  %s20, 128, %s22, [#allocation4], 128, 128, 8
    $region5: #{tpu_custom_call.1} parent=1 // pred_fallthru
      _
    // Predicated region
    $region6: #{tpu_custom_call.1} parent=1 // pred_check
      _
    $region7: #{tpu_custom_call.1} parent=1 // pred_check_branch
      %29 = sbr.rel (0) target = $region9
    $region8: #{tpu_custom_call.1} parent=1 // pred_region
      %31 = vsyncadd [#allocation6], 0
      %s32 = sshll.u32 %s1, 4
      %s33 = int_to_ptr.hbm [resolvable:$true] %s32
      %s34 = sshll.u32 [#allocation5], 4
      %s35 = int_to_ptr.vmem [resolvable:$true] %s34
      %40 = dma.hbm_to_vmem [thread:$0]  %s33, 256, %s35, [#allocation6], 128, 128, 8
    $region9: #{tpu_custom_call.1} parent=1 // pred_fallthru
      _
    // Predicated region
    $region10: #{tpu_custom_call.1} parent=1 // pred_check
      _
    $region11: #{tpu_custom_call.1} parent=1 // pred_check_branch
      %42 = sbr.rel (0) target = $region13
    $region12: #{tpu_custom_call.1} parent=1 // pred_region
      _
    $region13: #{tpu_custom_call.1} parent=1 // pred_fallthru
      _
    // Predicated region
    $region14: #{tpu_custom_call.1} parent=1 // pred_check
      _
    $region15: #{tpu_custom_call.1} parent=1 // pred_check_branch
      %44 = sbr.rel (0) target = $region17
    $region16: #{tpu_custom_call.1} parent=1 // pred_region
      _
    $region17: #{tpu_custom_call.1} parent=1 // pred_fallthru
      _
    // Predicated region
    $region18: #{tpu_custom_call.1} parent=1 // pred_check
      _
    $region19: #{tpu_custom_call.1} parent=1 // pred_check_branch
      %46 = sbr.rel (0) target = $region21
    $region20: #{tpu_custom_call.1} parent=1 // pred_region
      _
    $region21: #{tpu_custom_call.1} parent=1 // pred_fallthru
      _
    // Predicated region
    $region22: #{tpu_custom_call.1} parent=1 // pred_check
      _
    $region23: #{tpu_custom_call.1} parent=1 // pred_check_branch
      %48 = sbr.rel (0) target = $region25
    $region24: #{tpu_custom_call.1} parent=1 // pred_region
      _
    $region25: #{tpu_custom_call.1} parent=1 // pred_fallthru
      _
    // Predicated region
    $region26: #{tpu_custom_call.1} parent=1 // pred_check
      _
    $region27: #{tpu_custom_call.1} parent=1 // pred_check_branch
      %50 = sbr.rel (0) target = $region29
    $region28: #{tpu_custom_call.1} parent=1 // pred_region
      _
    $region29: #{tpu_custom_call.1} parent=1 // pred_fallthru
      _
    // Predicated region
    $region30: #{tpu_custom_call.1} parent=1 // pred_check
      _
    $region31: #{tpu_custom_call.1} parent=1 // pred_check_branch
      %52 = sbr.rel (0) target = $region33
    $region32: #{tpu_custom_call.1} parent=1 // pred_region
      %54 = dma.done [#allocation4], 2048
    $region33: #{tpu_custom_call.1} parent=1 // pred_fallthru
      _
    // Predicated region
    $region34: #{tpu_custom_call.1} parent=1 // pred_check
      _
    $region35: #{tpu_custom_call.1} parent=1 // pred_check_branch
      %56 = sbr.rel (0) target = $region37
    $region36: #{tpu_custom_call.1} parent=1 // pred_region
      %58 = dma.done [#allocation6], 256
    $region37: #{tpu_custom_call.1} parent=1 // pred_fallthru
      _
    %v59 = vld [vmem:[#allocation3] sm:$0xff]
    %v60 = vld [vmem:[#allocation3 + $0x8] sm:$0xff]
    %v61 = vld [vmem:[#allocation3 + $0x10] sm:$0xff]
    %v62 = vld [vmem:[#allocation3 + $0x18] sm:$0xff]
    %v63 = vld [vmem:[#allocation3 + $0x20] sm:$0xff]
    %v64 = vld [vmem:[#allocation3 + $0x28] sm:$0xff]
    %v65 = vld [vmem:[#allocation3 + $0x30] sm:$0xff]
    %v66 = vld [vmem:[#allocation3 + $0x38] sm:$0xff]
    %v67 = vld [vmem:[#allocation3 + $0x40] sm:$0xff]
    %v68 = vld [vmem:[#allocation3 + $0x48] sm:$0xff]
    %v69 = vld [vmem:[#allocation3 + $0x50] sm:$0xff]
    %v70 = vld [vmem:[#allocation3 + $0x58] sm:$0xff]
    %v71 = vld [vmem:[#allocation3 + $0x60] sm:$0xff]
    %v72 = vld [vmem:[#allocation3 + $0x68] sm:$0xff]
    %v73 = vld [vmem:[#allocation3 + $0x70] sm:$0xff]
    %v74 = vld [vmem:[#allocation3 + $0x78] sm:$0xff]
    %v75 = vld [vmem:[#allocation5] sm:$0xff]
    %v76 = vld [vmem:[#allocation5 + $0x8] sm:$0xff]
    %v77 = vld [vmem:[%s2] sm:$0x1]
    %v79 = vperm.slane %v77, 0
    %vm81 = vcmask 130048
    %v83 = vsel %vm81, %v59, 0
    %v86 = vsel %vm81, %v60, 0
    %v89 = vsel %vm81, %v61, 0
    %v92 = vsel %vm81, %v62, 0
    %v95 = vsel %vm81, %v63, 0
    %v98 = vsel %vm81, %v64, 0
    %v101 = vsel %vm81, %v65, 0
    %v104 = vsel %vm81, %v66, 0
    %v107 = vsel %vm81, %v67, 0
    %v110 = vsel %vm81, %v68, 0
    %v113 = vsel %vm81, %v69, 0
    %v116 = vsel %vm81, %v70, 0
    %v119 = vsel %vm81, %v71, 0
    %v122 = vsel %vm81, %v72, 0
    %v125 = vsel %vm81, %v73, 0
    %v128 = vsel %vm81, %v74, 0
    %130 = vmatpush.msra.mxu0 0.0
    %131 = vmatpush.msra.mxu0 0.0
    %132 = vmatpush.msra.mxu0 0.0
    %133 = vmatpush.msra.mxu0 0.0
    %134 = vmatpush.msra.mxu0 0.0
    %135 = vmatpush.msra.mxu0 0.0
    %136 = vmatpush.msra.mxu0 0.0
    %137 = vmatpush.msra.mxu0 0.0
    %138 = vmatpush.msra.mxu0 0.0
    %139 = vmatpush.msra.mxu0 0.0
    %140 = vmatpush.msra.mxu0 0.0
    %141 = vmatpush.msra.mxu0 0.0
    %142 = vmatpush.msra.mxu0 0.0
    %143 = vmatpush.msra.mxu0 0.0
    %144 = vmatpush.msra.mxu0 %v76
    %145 = vmatpush.msra.mxu0 %v75
    %146 = vmatmul.f32.gmra.mxu0 %v83
    %v147 = vpop.f32.mrf.mxu0
    %v148 = vadd.f32 %v79, %v147
    %149 = vmatmul.f32.gmra.mxu0 %v86
    %v150 = vpop.f32.mrf.mxu0
    %v151 = vadd.f32 %v79, %v150
    %152 = vmatmul.f32.gmra.mxu0 %v89
    %v153 = vpop.f32.mrf.mxu0
    %v154 = vadd.f32 %v79, %v153
    %155 = vmatmul.f32.gmra.mxu0 %v92
    %v156 = vpop.f32.mrf.mxu0
    %v157 = vadd.f32 %v79, %v156
    %158 = vmatmul.f32.gmra.mxu0 %v95
    %v159 = vpop.f32.mrf.mxu0
    %v160 = vadd.f32 %v79, %v159
    %161 = vmatmul.f32.gmra.mxu0 %v98
    %v162 = vpop.f32.mrf.mxu0
    %v163 = vadd.f32 %v79, %v162
    %164 = vmatmul.f32.gmra.mxu0 %v101
    %v165 = vpop.f32.mrf.mxu0
    %v166 = vadd.f32 %v79, %v165
    %167 = vmatmul.f32.gmra.mxu0 %v104
    %v168 = vpop.f32.mrf.mxu0
    %v169 = vadd.f32 %v79, %v168
    %170 = vmatmul.f32.gmra.mxu0 %v107
    %v171 = vpop.f32.mrf.mxu0
    %v172 = vadd.f32 %v79, %v171
    %173 = vmatmul.f32.gmra.mxu0 %v110
    %v174 = vpop.f32.mrf.mxu0
    %v175 = vadd.f32 %v79, %v174
    %176 = vmatmul.f32.gmra.mxu0 %v113
    %v177 = vpop.f32.mrf.mxu0
    %v178 = vadd.f32 %v79, %v177
    %179 = vmatmul.f32.gmra.mxu0 %v116
    %v180 = vpop.f32.mrf.mxu0
    %v181 = vadd.f32 %v79, %v180
    %182 = vmatmul.f32.gmra.mxu0 %v119
    %v183 = vpop.f32.mrf.mxu0
    %v184 = vadd.f32 %v79, %v183
    %185 = vmatmul.f32.gmra.mxu0 %v122
    %v186 = vpop.f32.mrf.mxu0
    %v187 = vadd.f32 %v79, %v186
    %188 = vmatmul.f32.gmra.mxu0 %v125
    %v189 = vpop.f32.mrf.mxu0
    %v190 = vadd.f32 %v79, %v189
    %191 = vmatmul.f32.gmra.mxu0 %v128
    %v192 = vpop.f32.mrf.mxu0
    %v193 = vadd.f32 %v79, %v192
    %194 = vdwg.mxu0
    %v195 = vmax.f32 %v148, 0.0
    %v196 = vmax.f32 %v151, 0.0
    %v197 = vmax.f32 %v154, 0.0
    %v198 = vmax.f32 %v157, 0.0
    %v199 = vmax.f32 %v160, 0.0
    %v200 = vmax.f32 %v163, 0.0
    %v201 = vmax.f32 %v166, 0.0
    %v202 = vmax.f32 %v169, 0.0
    %v203 = vmax.f32 %v172, 0.0
    %v204 = vmax.f32 %v175, 0.0
    %v205 = vmax.f32 %v178, 0.0
    %v206 = vmax.f32 %v181, 0.0
    %v207 = vmax.f32 %v184, 0.0
    %v208 = vmax.f32 %v187, 0.0
    %v209 = vmax.f32 %v190, 0.0
    %v210 = vmax.f32 %v193, 0.0
    %v211 = vld [vmem:[%s3] sm:$0xff]
    %v212 = vld [vmem:[%s3 + $0x8] sm:$0xff]
    %v213 = vld [vmem:[%s3 + $0x10] sm:$0xff]
    %v214 = vld [vmem:[%s3 + $0x18] sm:$0xff]
    %v215 = vld [vmem:[%s3 + $0x20] sm:$0xff]
    %v216 = vld [vmem:[%s3 + $0x28] sm:$0xff]
    %v217 = vld [vmem:[%s3 + $0x30] sm:$0xff]
    %v218 = vld [vmem:[%s3 + $0x38] sm:$0xff]
    %v219 = vld [vmem:[%s3 + $0x40] sm:$0xff]
    %v220 = vld [vmem:[%s3 + $0x48] sm:$0xff]
    %v221 = vld [vmem:[%s3 + $0x50] sm:$0xff]
    %v222 = vld [vmem:[%s3 + $0x58] sm:$0xff]
    %v223 = vld [vmem:[%s3 + $0x60] sm:$0xff]
    %v224 = vld [vmem:[%s3 + $0x68] sm:$0xff]
    %v225 = vld [vmem:[%s3 + $0x70] sm:$0xff]
    %v226 = vld [vmem:[%s3 + $0x78] sm:$0xff]
    %v227 = vld [vmem:[%s4] sm:$0x1]
    %v229 = vperm.slane %v227, 0
    %231 = vmatpush.msra.mxu0 %v226
    %232 = vmatpush.msra.mxu0 %v225
    %233 = vmatpush.msra.mxu0 %v224
    %234 = vmatpush.msra.mxu0 %v223
    %235 = vmatpush.msra.mxu0 %v222
    %236 = vmatpush.msra.mxu0 %v221
    %237 = vmatpush.msra.mxu0 %v220
    %238 = vmatpush.msra.mxu0 %v219
    %239 = vmatpush.msra.mxu0 %v218
    %240 = vmatpush.msra.mxu0 %v217
    %241 = vmatpush.msra.mxu0 %v216
    %242 = vmatpush.msra.mxu0 %v215
    %243 = vmatpush.msra.mxu0 %v214
    %244 = vmatpush.msra.mxu0 %v213
    %245 = vmatpush.msra.mxu0 %v212
    %246 = vmatpush.msra.mxu0 %v211
    %247 = vmatmul.f32.gmra.mxu0 %v195
    %v248 = vpop.f32.mrf.mxu0
    %v249 = vadd.f32 %v229, %v248
    %250 = vmatmul.f32.gmra.mxu0 %v196
    %v251 = vpop.f32.mrf.mxu0
    %v252 = vadd.f32 %v229, %v251
    %253 = vmatmul.f32.gmra.mxu0 %v197
    %v254 = vpop.f32.mrf.mxu0
    %v255 = vadd.f32 %v229, %v254
    %256 = vmatmul.f32.gmra.mxu0 %v198
    %v257 = vpop.f32.mrf.mxu0
    %v258 = vadd.f32 %v229, %v257
    %259 = vmatmul.f32.gmra.mxu0 %v199
    %v260 = vpop.f32.mrf.mxu0
    %v261 = vadd.f32 %v229, %v260
    %262 = vmatmul.f32.gmra.mxu0 %v200
    %v263 = vpop.f32.mrf.mxu0
    %v264 = vadd.f32 %v229, %v263
    %265 = vmatmul.f32.gmra.mxu0 %v201
    %v266 = vpop.f32.mrf.mxu0
    %v267 = vadd.f32 %v229, %v266
    %268 = vmatmul.f32.gmra.mxu0 %v202
    %v269 = vpop.f32.mrf.mxu0
    %v270 = vadd.f32 %v229, %v269
    %271 = vmatmul.f32.gmra.mxu0 %v203
    %v272 = vpop.f32.mrf.mxu0
    %v273 = vadd.f32 %v229, %v272
    %274 = vmatmul.f32.gmra.mxu0 %v204
    %v275 = vpop.f32.mrf.mxu0
    %v276 = vadd.f32 %v229, %v275
    %277 = vmatmul.f32.gmra.mxu0 %v205
    %v278 = vpop.f32.mrf.mxu0
    %v279 = vadd.f32 %v229, %v278
    %280 = vmatmul.f32.gmra.mxu0 %v206
    %v281 = vpop.f32.mrf.mxu0
    %v282 = vadd.f32 %v229, %v281
    %283 = vmatmul.f32.gmra.mxu0 %v207
    %v284 = vpop.f32.mrf.mxu0
    %v285 = vadd.f32 %v229, %v284
    %286 = vmatmul.f32.gmra.mxu0 %v208
    %v287 = vpop.f32.mrf.mxu0
    %v288 = vadd.f32 %v229, %v287
    %289 = vmatmul.f32.gmra.mxu0 %v209
    %v290 = vpop.f32.mrf.mxu0
    %v291 = vadd.f32 %v229, %v290
    %292 = vmatmul.f32.gmra.mxu0 %v210
    %v293 = vpop.f32.mrf.mxu0
    %v294 = vadd.f32 %v229, %v293
    %295 = vdwg.mxu0
    %v296 = vmax.f32 %v249, 0.0
    %v297 = vmax.f32 %v252, 0.0
    %v298 = vmax.f32 %v255, 0.0
    %v299 = vmax.f32 %v258, 0.0
    %v300 = vmax.f32 %v261, 0.0
    %v301 = vmax.f32 %v264, 0.0
    %v302 = vmax.f32 %v267, 0.0
    %v303 = vmax.f32 %v270, 0.0
    %v304 = vmax.f32 %v273, 0.0
    %v305 = vmax.f32 %v276, 0.0
    %v306 = vmax.f32 %v279, 0.0
    %v307 = vmax.f32 %v282, 0.0
    %v308 = vmax.f32 %v285, 0.0
    %v309 = vmax.f32 %v288, 0.0
    %v310 = vmax.f32 %v291, 0.0
    %v311 = vmax.f32 %v294, 0.0
    %v312 = vld [vmem:[%s5] sm:$0xff]
    %v313 = vld [vmem:[%s5 + $0x8] sm:$0xff]
    %v314 = vld [vmem:[%s5 + $0x10] sm:$0xff]
    %v315 = vld [vmem:[%s5 + $0x18] sm:$0xff]
    %v316 = vld [vmem:[%s5 + $0x20] sm:$0xff]
    %v317 = vld [vmem:[%s5 + $0x28] sm:$0xff]
    %v318 = vld [vmem:[%s5 + $0x30] sm:$0xff]
    %v319 = vld [vmem:[%s5 + $0x38] sm:$0xff]
    %v320 = vld [vmem:[%s5 + $0x40] sm:$0xff]
    %v321 = vld [vmem:[%s5 + $0x48] sm:$0xff]
    %v322 = vld [vmem:[%s5 + $0x50] sm:$0xff]
    %v323 = vld [vmem:[%s5 + $0x58] sm:$0xff]
    %v324 = vld [vmem:[%s5 + $0x60] sm:$0xff]
    %v325 = vld [vmem:[%s5 + $0x68] sm:$0xff]
    %v326 = vld [vmem:[%s5 + $0x70] sm:$0xff]
    %v327 = vld [vmem:[%s5 + $0x78] sm:$0xff]
    %s328 = sld [smem:[#allocation2]]
    %v329 = vstv %s328
    %330 = vmatpush.msra.mxu0 %v327
    %331 = vmatpush.msra.mxu0 %v326
    %332 = vmatpush.msra.mxu0 %v325
    %333 = vmatpush.msra.mxu0 %v324
    %334 = vmatpush.msra.mxu0 %v323
    %335 = vmatpush.msra.mxu0 %v322
    %336 = vmatpush.msra.mxu0 %v321
    %337 = vmatpush.msra.mxu0 %v320
    %338 = vmatpush.msra.mxu0 %v319
    %339 = vmatpush.msra.mxu0 %v318
    %340 = vmatpush.msra.mxu0 %v317
    %341 = vmatpush.msra.mxu0 %v316
    %342 = vmatpush.msra.mxu0 %v315
    %343 = vmatpush.msra.mxu0 %v314
    %344 = vmatpush.msra.mxu0 %v313
    %345 = vmatpush.msra.mxu0 %v312
    %346 = vmatmul.f32.gmra.mxu0 %v296
    %v347 = vpop.f32.mrf.mxu0
    %v348 = vadd.f32 %v329, %v347
    %349 = vmatmul.f32.gmra.mxu0 %v297
    %v350 = vpop.f32.mrf.mxu0
    %v351 = vadd.f32 %v329, %v350
    %352 = vmatmul.f32.gmra.mxu0 %v298
    %v353 = vpop.f32.mrf.mxu0
    %v354 = vadd.f32 %v329, %v353
    %355 = vmatmul.f32.gmra.mxu0 %v299
    %v356 = vpop.f32.mrf.mxu0
    %v357 = vadd.f32 %v329, %v356
    %358 = vmatmul.f32.gmra.mxu0 %v300
    %v359 = vpop.f32.mrf.mxu0
    %v360 = vadd.f32 %v329, %v359
    %361 = vmatmul.f32.gmra.mxu0 %v301
    %v362 = vpop.f32.mrf.mxu0
    %v363 = vadd.f32 %v329, %v362
    %364 = vmatmul.f32.gmra.mxu0 %v302
    %v365 = vpop.f32.mrf.mxu0
    %v366 = vadd.f32 %v329, %v365
    %367 = vmatmul.f32.gmra.mxu0 %v303
    %v368 = vpop.f32.mrf.mxu0
    %v369 = vadd.f32 %v329, %v368
    %370 = vmatmul.f32.gmra.mxu0 %v304
    %v371 = vpop.f32.mrf.mxu0
    %v372 = vadd.f32 %v329, %v371
    %373 = vmatmul.f32.gmra.mxu0 %v305
    %v374 = vpop.f32.mrf.mxu0
    %v375 = vadd.f32 %v329, %v374
    %376 = vmatmul.f32.gmra.mxu0 %v306
    %v377 = vpop.f32.mrf.mxu0
    %v378 = vadd.f32 %v329, %v377
    %379 = vmatmul.f32.gmra.mxu0 %v307
    %v380 = vpop.f32.mrf.mxu0
    %v381 = vadd.f32 %v329, %v380
    %382 = vmatmul.f32.gmra.mxu0 %v308
    %v383 = vpop.f32.mrf.mxu0
    %v384 = vadd.f32 %v329, %v383
    %385 = vmatmul.f32.gmra.mxu0 %v309
    %v386 = vpop.f32.mrf.mxu0
    %v387 = vadd.f32 %v329, %v386
    %388 = vmatmul.f32.gmra.mxu0 %v310
    %v389 = vpop.f32.mrf.mxu0
    %v390 = vadd.f32 %v329, %v389
    %391 = vmatmul.f32.gmra.mxu0 %v311
    %v392 = vpop.f32.mrf.mxu0
    %v393 = vadd.f32 %v329, %v392
    %394 = vdwg.mxu0
    %vm395 = vcmask 7168
    %396 = vst.msk [vmem:[%s7] sm:$0xff] %vm395, %v348
    %397 = vst.msk [vmem:[%s7 + $0x8] sm:$0xff] %vm395, %v351
    %398 = vst.msk [vmem:[%s7 + $0x10] sm:$0xff] %vm395, %v354
    %399 = vst.msk [vmem:[%s7 + $0x18] sm:$0xff] %vm395, %v357
    %400 = vst.msk [vmem:[%s7 + $0x20] sm:$0xff] %vm395, %v360
    %401 = vst.msk [vmem:[%s7 + $0x28] sm:$0xff] %vm395, %v363
    %402 = vst.msk [vmem:[%s7 + $0x30] sm:$0xff] %vm395, %v366
    %403 = vst.msk [vmem:[%s7 + $0x38] sm:$0xff] %vm395, %v369
    %404 = vst.msk [vmem:[%s7 + $0x40] sm:$0xff] %vm395, %v372
    %405 = vst.msk [vmem:[%s7 + $0x48] sm:$0xff] %vm395, %v375
    %406 = vst.msk [vmem:[%s7 + $0x50] sm:$0xff] %vm395, %v378
    %407 = vst.msk [vmem:[%s7 + $0x58] sm:$0xff] %vm395, %v381
    %408 = vst.msk [vmem:[%s7 + $0x60] sm:$0xff] %vm395, %v384
    %409 = vst.msk [vmem:[%s7 + $0x68] sm:$0xff] %vm395, %v387
    %410 = vst.msk [vmem:[%s7 + $0x70] sm:$0xff] %vm395, %v390
    %411 = vst.msk [vmem:[%s7 + $0x78] sm:$0xff] %vm395, %v393
    // Predicated region
    $region38: #{tpu_custom_call.1} parent=1 // pred_check
      _
    $region39: #{tpu_custom_call.1} parent=1 // pred_check_branch
      %413 = sbr.rel (0) target = $region41
    $region40: #{tpu_custom_call.1} parent=1 // pred_region
      _
    $region41: #{tpu_custom_call.1} parent=1 // pred_fallthru
      _
    // Predicated region
    $region42: #{tpu_custom_call.1} parent=1 // pred_check
      _
    $region43: #{tpu_custom_call.1} parent=1 // pred_check_branch
      %415 = sbr.rel (0) target = $region45
    $region44: #{tpu_custom_call.1} parent=1 // pred_region
      _
    $region45: #{tpu_custom_call.1} parent=1 // pred_fallthru
      _
    %416 = vsyncpa [#allocation4], 1
    %417 = vsyncpa [#allocation6], 1

</llo_original>
